<compile_context>
chip_gen: v7x
topology: tpu7x:2x2x1
jax: 0.10.0
libtpu: 0.0.40
codegen_flags: <defaults>
</compile_context>

<pallas_src>
import jax
import jax.numpy as jnp
from jax.experimental import pallas as pl
from jax.experimental.pallas import tpu as pltpu


def _siam_lstm_kernel(gx_ref, h0_ref, c0_ref, whh_ref, out_ref):
    """Full-sequence LSTM recurrence for the batch-fused siamese pair.

    gx_ref : (S, BB, 4H) pre-projected + biased input gates (g-columns pre-scaled x2)
    h0_ref : (BB, H)     initial hidden (both branches, padded batch)
    c0_ref : (BB, H)     initial cell
    whh_ref: (H, 4H)     W_hh^T (g-columns pre-scaled x2)
    out_ref: (BB, H)     final hidden state (== lstm output[-1])
    """
    BB, H = out_ref.shape
    S = gx_ref.shape[0]

    whh = whh_ref[...]            # resident (H, 4H)

    def step(t, carry):
        h, c = carry
        # Whole-tile load of this step's pre-projected gates + one small MXU matmul.
        gates = gx_ref[t] + jnp.dot(h, whh, preferred_element_type=jnp.float32)

        # One full-width transcendental per step; tanh(g) = 2*sigmoid(2g) - 1
        # (the x2 is folded into the weights/table in the wrapper).
        sig = jax.nn.sigmoid(gates)
        i_g = sig[:, 0 * H:1 * H]
        f_g = sig[:, 1 * H:2 * H]
        g_g = 2.0 * sig[:, 2 * H:3 * H] - 1.0
        o_g = sig[:, 3 * H:4 * H]

        c_new = f_g * c + i_g * g_g
        h_new = o_g * jnp.tanh(c_new)
        return h_new, c_new

    unroll = True if S <= 16 else 8   # bound unroll for long sequences
    h, _ = jax.lax.fori_loop(0, S, step, (h0_ref[...], c0_ref[...]),
                             unroll=unroll)
    out_ref[...] = h.astype(out_ref.dtype)


def _siam_lstm_call(gx, h0, c0, w_hh_t):
    """gx: (S, BB, 4H); h0/c0: (BB, H); w_hh_t: (H, 4H)."""
    S, BB, G = gx.shape
    H = h0.shape[-1]
    vmem = pl.BlockSpec(memory_space=pltpu.MemorySpace.VMEM)
    # Grid-less launch: whole arrays resident in VMEM, read once, no double-buffering.
    return pl.pallas_call(
        _siam_lstm_kernel,
        out_shape=jax.ShapeDtypeStruct((BB, H), jnp.float32),
        in_specs=[vmem, vmem, vmem, vmem],
        out_specs=vmem,
    )(gx, h0, c0, w_hh_t)


@jax.jit
def siam_forward(input1, input2, hidden1, context,
                 embed_w, w_ih, w_hh, b_ih, b_hh):
    """Mirrors siam.forward(input1, input2, hidden1, context) -> (out1, out2)."""
    B, S = input1.shape
    H = hidden1.shape[-1]

    # g-gate columns (2H:3H) pre-scaled by 2 so the kernel can use tanh(x)=2*sigmoid(2x)-1.
    gate_scale = jnp.concatenate(
        [jnp.ones((2 * H,), jnp.float32),
         2.0 * jnp.ones((H,), jnp.float32),
         jnp.ones((H,), jnp.float32)])                               # (4H,)

    # Algorithmic fold: embedding + input projection == lookup into a (vocab, 4H) table.
    table = (embed_w @ w_ih.T + (b_ih + b_hh)) * gate_scale          # (vocab, 4H)
    w_hh_t = w_hh.T * gate_scale                                     # (H, 4H)

    # Fuse the two siamese branches along the batch axis (shared weights & state).
    tokens = jnp.concatenate([input1, input2], axis=0)               # (2B, S)
    # TODO(synk): the token-id gather stays as plain-JAX glue (jnp.take); an in-kernel
    # gather via scalar-prefetched ids + pl.Element BlockSpec is possible but unneeded here.
    gx = jnp.take(table, tokens, axis=0)                             # (2B, S, 4H)
    gx = jnp.transpose(gx, (1, 0, 2))                                # (S, 2B, 4H) seq-major

    h0 = jnp.concatenate([hidden1[0], hidden1[0]], axis=0)           # (2B, H)
    c0 = jnp.concatenate([context[0], context[0]], axis=0)           # (2B, H)

    # Pad the fused batch to a multiple of 8 sublanes for full-tile loads/stores.
    BB = 2 * B
    BB_pad = max(8, ((BB + 7) // 8) * 8)
    pad = BB_pad - BB
    if pad:
        gx = jnp.pad(gx, ((0, 0), (0, pad), (0, 0)))
        h0 = jnp.pad(h0, ((0, pad), (0, 0)))
        c0 = jnp.pad(c0, ((0, pad), (0, 0)))

    out = _siam_lstm_call(gx, h0, c0, w_hh_t)                        # (BB_pad, H)
    return out[:B], out[B:BB]


def _lstm_ref(x_seq, h0, c0, w_ih, w_hh, b_ih, b_hh):
    """Pure-JAX reference (lax.scan) of PyTorch nn.LSTM, for validation."""
    H = h0.shape[-1]

    def step(carry, x):
        h, c = carry
        gates = x @ w_ih.T + h @ w_hh.T + b_ih + b_hh
        i = jax.nn.sigmoid(gates[:, 0 * H:1 * H])
        f = jax.nn.sigmoid(gates[:, 1 * H:2 * H])
        g = jnp.tanh(gates[:, 2 * H:3 * H])
        o = jax.nn.sigmoid(gates[:, 3 * H:4 * H])
        c_new = f * c + i * g
        h_new = o * jnp.tanh(c_new)
        return (h_new, c_new), h_new

    (_, _), hs = jax.lax.scan(step, (h0[0], c0[0]), x_seq)
    return hs[-1]


if __name__ == "__main__":
    vocab_size = 50
    B, S, E, H = 2, 8, 32, 32   # small shapes: batch=2, seq=8, embed=32, hidden=32

    key = jax.random.PRNGKey(0)
    ks = jax.random.split(key, 8)
    embed_w = 0.1 * jax.random.normal(ks[0], (vocab_size, E), jnp.float32)
    w_ih = 0.1 * jax.random.normal(ks[1], (4 * H, E), jnp.float32)
    w_hh = 0.1 * jax.random.normal(ks[2], (4 * H, H), jnp.float32)
    b_ih = 0.1 * jax.random.normal(ks[3], (4 * H,), jnp.float32)
    b_hh = 0.1 * jax.random.normal(ks[4], (4 * H,), jnp.float32)

    input1 = jax.random.randint(ks[5], (B, S), 0, vocab_size, jnp.int32)
    input2 = jax.random.randint(ks[6], (B, S), 0, vocab_size, jnp.int32)
    hidden1 = jax.random.normal(ks[7], (1, B, H), jnp.float32)
    context = jnp.zeros((1, B, H), jnp.float32)

    out1, out2 = siam_forward(input1, input2, hidden1, context,
                              embed_w, w_ih, w_hh, b_ih, b_hh)
    jax.block_until_ready((out1, out2))

    # Validate against pure-JAX reference of the PyTorch semantics.
    for toks, out in ((input1, out1), (input2, out2)):
        emb = jnp.transpose(jnp.take(embed_w, toks, axis=0), (1, 0, 2))
        ref = _lstm_ref(emb, hidden1, context, w_ih, w_hh, b_ih, b_hh)
        assert jnp.allclose(out, ref, atol=1e-4, rtol=1e-4), \
            f"mismatch: max abs err {jnp.max(jnp.abs(out - ref))}"

    print("KERNEL_OK")
</pallas_src>

<mosaic_0001>
module attributes {stable_mosaic.version = 11 : i64} {
  func.func @_siam_lstm_kernel(%arg0: memref<8x8x128xf32, #tpu.memory_space<vmem>>, %arg1: memref<8x32xf32, #tpu.memory_space<vmem>>, %arg2: memref<8x32xf32, #tpu.memory_space<vmem>>, %arg3: memref<32x128xf32, #tpu.memory_space<vmem>>, %arg4: memref<8x32xf32, #tpu.memory_space<vmem>>) attributes {dimension_semantics = [], scalar_prefetch = 0 : i64, scratch_operands = 0 : i64, tpu.core_type = #tpu.core_type<tc>} {
    %c0 = arith.constant 0 : index
    %c0_0 = arith.constant 0 : index
    %0 = vector.load %arg3[%c0, %c0_0] : memref<32x128xf32, #tpu.memory_space<vmem>>, vector<32x128xf32>
    %c0_1 = arith.constant 0 : index
    %c0_2 = arith.constant 0 : index
    %1 = vector.load %arg1[%c0_1, %c0_2] : memref<8x32xf32, #tpu.memory_space<vmem>>, vector<8x32xf32>
    %c0_3 = arith.constant 0 : index
    %c0_4 = arith.constant 0 : index
    %2 = vector.load %arg2[%c0_3, %c0_4] : memref<8x32xf32, #tpu.memory_space<vmem>>, vector<8x32xf32>
    %c0_i32 = arith.constant 0 : i32
    %3 = arith.index_cast %c0_i32 : i32 to index
    %c0_5 = arith.constant 0 : index
    %c0_6 = arith.constant 0 : index
    %4 = vector.load %arg0[%3, %c0_5, %c0_6] : memref<8x8x128xf32, #tpu.memory_space<vmem>>, vector<1x8x128xf32>
    %5 = vector.shape_cast %4 : vector<1x8x128xf32> to vector<8x128xf32>
    %cst = arith.constant dense<0.000000e+00> : vector<8x128xf32>
    %6 = tpu.matmul %1, %0, %cst {dimension_numbers = #tpu.dot_dimension_numbers<[1], [0], [0], [1], [0, 0, 1, 1], [], []>} : vector<8x32xf32>, vector<32x128xf32>, vector<8x128xf32> -> vector<8x128xf32>
    %7 = arith.addf %5, %6 : vector<8x128xf32>
    %8 = arith.negf %7 : vector<8x128xf32>
    %9 = math.exp %8 : vector<8x128xf32>
    %cst_7 = arith.constant 1.000000e+00 : f32
    %10 = vector.broadcast %cst_7 : f32 to vector<8x128xf32>
    %11 = arith.addf %10, %9 : vector<8x128xf32>
    %12 = arith.divf %10, %11 : vector<8x128xf32>
    %13 = vector.extract_strided_slice %12 {offsets = [0, 0], sizes = [8, 32], strides = [1, 1]} : vector<8x128xf32> to vector<8x32xf32>
    %14 = vector.extract_strided_slice %12 {offsets = [0, 32], sizes = [8, 32], strides = [1, 1]} : vector<8x128xf32> to vector<8x32xf32>
    %15 = vector.extract_strided_slice %12 {offsets = [0, 64], sizes = [8, 32], strides = [1, 1]} : vector<8x128xf32> to vector<8x32xf32>
    %cst_8 = arith.constant 2.000000e+00 : f32
    %16 = vector.broadcast %cst_8 : f32 to vector<8x32xf32>
    %17 = arith.mulf %16, %15 : vector<8x32xf32>
    %cst_9 = arith.constant 1.000000e+00 : f32
    %18 = vector.broadcast %cst_9 : f32 to vector<8x32xf32>
    %19 = arith.subf %17, %18 : vector<8x32xf32>
    %20 = vector.extract_strided_slice %12 {offsets = [0, 96], sizes = [8, 32], strides = [1, 1]} : vector<8x128xf32> to vector<8x32xf32>
    %21 = arith.mulf %14, %2 : vector<8x32xf32>
    %22 = arith.mulf %13, %19 : vector<8x32xf32>
    %23 = arith.addf %21, %22 : vector<8x32xf32>
    %24 = math.tanh %23 : vector<8x32xf32>
    %25 = arith.mulf %20, %24 : vector<8x32xf32>
    %c1_i32 = arith.constant 1 : i32
    %26 = arith.index_cast %c1_i32 : i32 to index
    %c0_10 = arith.constant 0 : index
    %c0_11 = arith.constant 0 : index
    %27 = vector.load %arg0[%26, %c0_10, %c0_11] : memref<8x8x128xf32, #tpu.memory_space<vmem>>, vector<1x8x128xf32>
    %28 = vector.shape_cast %27 : vector<1x8x128xf32> to vector<8x128xf32>
    %cst_12 = arith.constant dense<0.000000e+00> : vector<8x128xf32>
    %29 = tpu.matmul %25, %0, %cst_12 {dimension_numbers = #tpu.dot_dimension_numbers<[1], [0], [0], [1], [0, 0, 1, 1], [], []>} : vector<8x32xf32>, vector<32x128xf32>, vector<8x128xf32> -> vector<8x128xf32>
    %30 = arith.addf %28, %29 : vector<8x128xf32>
    %31 = arith.negf %30 : vector<8x128xf32>
    %32 = math.exp %31 : vector<8x128xf32>
    %cst_13 = arith.constant 1.000000e+00 : f32
    %33 = vector.broadcast %cst_13 : f32 to vector<8x128xf32>
    %34 = arith.addf %33, %32 : vector<8x128xf32>
    %35 = arith.divf %33, %34 : vector<8x128xf32>
    %36 = vector.extract_strided_slice %35 {offsets = [0, 0], sizes = [8, 32], strides = [1, 1]} : vector<8x128xf32> to vector<8x32xf32>
    %37 = vector.extract_strided_slice %35 {offsets = [0, 32], sizes = [8, 32], strides = [1, 1]} : vector<8x128xf32> to vector<8x32xf32>
    %38 = vector.extract_strided_slice %35 {offsets = [0, 64], sizes = [8, 32], strides = [1, 1]} : vector<8x128xf32> to vector<8x32xf32>
    %cst_14 = arith.constant 2.000000e+00 : f32
    %39 = vector.broadcast %cst_14 : f32 to vector<8x32xf32>
    %40 = arith.mulf %39, %38 : vector<8x32xf32>
    %cst_15 = arith.constant 1.000000e+00 : f32
    %41 = vector.broadcast %cst_15 : f32 to vector<8x32xf32>
    %42 = arith.subf %40, %41 : vector<8x32xf32>
    %43 = vector.extract_strided_slice %35 {offsets = [0, 96], sizes = [8, 32], strides = [1, 1]} : vector<8x128xf32> to vector<8x32xf32>
    %44 = arith.mulf %37, %23 : vector<8x32xf32>
    %45 = arith.mulf %36, %42 : vector<8x32xf32>
    %46 = arith.addf %44, %45 : vector<8x32xf32>
    %47 = math.tanh %46 : vector<8x32xf32>
    %48 = arith.mulf %43, %47 : vector<8x32xf32>
    %c2_i32 = arith.constant 2 : i32
    %49 = arith.index_cast %c2_i32 : i32 to index
    %c0_16 = arith.constant 0 : index
    %c0_17 = arith.constant 0 : index
    %50 = vector.load %arg0[%49, %c0_16, %c0_17] : memref<8x8x128xf32, #tpu.memory_space<vmem>>, vector<1x8x128xf32>
    %51 = vector.shape_cast %50 : vector<1x8x128xf32> to vector<8x128xf32>
    %cst_18 = arith.constant dense<0.000000e+00> : vector<8x128xf32>
    %52 = tpu.matmul %48, %0, %cst_18 {dimension_numbers = #tpu.dot_dimension_numbers<[1], [0], [0], [1], [0, 0, 1, 1], [], []>} : vector<8x32xf32>, vector<32x128xf32>, vector<8x128xf32> -> vector<8x128xf32>
    %53 = arith.addf %51, %52 : vector<8x128xf32>
    %54 = arith.negf %53 : vector<8x128xf32>
    %55 = math.exp %54 : vector<8x128xf32>
    %cst_19 = arith.constant 1.000000e+00 : f32
    %56 = vector.broadcast %cst_19 : f32 to vector<8x128xf32>
    %57 = arith.addf %56, %55 : vector<8x128xf32>
    %58 = arith.divf %56, %57 : vector<8x128xf32>
    %59 = vector.extract_strided_slice %58 {offsets = [0, 0], sizes = [8, 32], strides = [1, 1]} : vector<8x128xf32> to vector<8x32xf32>
    %60 = vector.extract_strided_slice %58 {offsets = [0, 32], sizes = [8, 32], strides = [1, 1]} : vector<8x128xf32> to vector<8x32xf32>
    %61 = vector.extract_strided_slice %58 {offsets = [0, 64], sizes = [8, 32], strides = [1, 1]} : vector<8x128xf32> to vector<8x32xf32>
    %cst_20 = arith.constant 2.000000e+00 : f32
    %62 = vector.broadcast %cst_20 : f32 to vector<8x32xf32>
    %63 = arith.mulf %62, %61 : vector<8x32xf32>
    %cst_21 = arith.constant 1.000000e+00 : f32
    %64 = vector.broadcast %cst_21 : f32 to vector<8x32xf32>
    %65 = arith.subf %63, %64 : vector<8x32xf32>
    %66 = vector.extract_strided_slice %58 {offsets = [0, 96], sizes = [8, 32], strides = [1, 1]} : vector<8x128xf32> to vector<8x32xf32>
    %67 = arith.mulf %60, %46 : vector<8x32xf32>
    %68 = arith.mulf %59, %65 : vector<8x32xf32>
    %69 = arith.addf %67, %68 : vector<8x32xf32>
    %70 = math.tanh %69 : vector<8x32xf32>
    %71 = arith.mulf %66, %70 : vector<8x32xf32>
    %c3_i32 = arith.constant 3 : i32
    %72 = arith.index_cast %c3_i32 : i32 to index
    %c0_22 = arith.constant 0 : index
    %c0_23 = arith.constant 0 : index
    %73 = vector.load %arg0[%72, %c0_22, %c0_23] : memref<8x8x128xf32, #tpu.memory_space<vmem>>, vector<1x8x128xf32>
    %74 = vector.shape_cast %73 : vector<1x8x128xf32> to vector<8x128xf32>
    %cst_24 = arith.constant dense<0.000000e+00> : vector<8x128xf32>
    %75 = tpu.matmul %71, %0, %cst_24 {dimension_numbers = #tpu.dot_dimension_numbers<[1], [0], [0], [1], [0, 0, 1, 1], [], []>} : vector<8x32xf32>, vector<32x128xf32>, vector<8x128xf32> -> vector<8x128xf32>
    %76 = arith.addf %74, %75 : vector<8x128xf32>
    %77 = arith.negf %76 : vector<8x128xf32>
    %78 = math.exp %77 : vector<8x128xf32>
    %cst_25 = arith.constant 1.000000e+00 : f32
    %79 = vector.broadcast %cst_25 : f32 to vector<8x128xf32>
    %80 = arith.addf %79, %78 : vector<8x128xf32>
    %81 = arith.divf %79, %80 : vector<8x128xf32>
    %82 = vector.extract_strided_slice %81 {offsets = [0, 0], sizes = [8, 32], strides = [1, 1]} : vector<8x128xf32> to vector<8x32xf32>
    %83 = vector.extract_strided_slice %81 {offsets = [0, 32], sizes = [8, 32], strides = [1, 1]} : vector<8x128xf32> to vector<8x32xf32>
    %84 = vector.extract_strided_slice %81 {offsets = [0, 64], sizes = [8, 32], strides = [1, 1]} : vector<8x128xf32> to vector<8x32xf32>
    %cst_26 = arith.constant 2.000000e+00 : f32
    %85 = vector.broadcast %cst_26 : f32 to vector<8x32xf32>
    %86 = arith.mulf %85, %84 : vector<8x32xf32>
    %cst_27 = arith.constant 1.000000e+00 : f32
    %87 = vector.broadcast %cst_27 : f32 to vector<8x32xf32>
    %88 = arith.subf %86, %87 : vector<8x32xf32>
    %89 = vector.extract_strided_slice %81 {offsets = [0, 96], sizes = [8, 32], strides = [1, 1]} : vector<8x128xf32> to vector<8x32xf32>
    %90 = arith.mulf %83, %69 : vector<8x32xf32>
    %91 = arith.mulf %82, %88 : vector<8x32xf32>
    %92 = arith.addf %90, %91 : vector<8x32xf32>
    %93 = math.tanh %92 : vector<8x32xf32>
    %94 = arith.mulf %89, %93 : vector<8x32xf32>
    %c4_i32 = arith.constant 4 : i32
    %95 = arith.index_cast %c4_i32 : i32 to index
    %c0_28 = arith.constant 0 : index
    %c0_29 = arith.constant 0 : index
    %96 = vector.load %arg0[%95, %c0_28, %c0_29] : memref<8x8x128xf32, #tpu.memory_space<vmem>>, vector<1x8x128xf32>
    %97 = vector.shape_cast %96 : vector<1x8x128xf32> to vector<8x128xf32>
    %cst_30 = arith.constant dense<0.000000e+00> : vector<8x128xf32>
    %98 = tpu.matmul %94, %0, %cst_30 {dimension_numbers = #tpu.dot_dimension_numbers<[1], [0], [0], [1], [0, 0, 1, 1], [], []>} : vector<8x32xf32>, vector<32x128xf32>, vector<8x128xf32> -> vector<8x128xf32>
    %99 = arith.addf %97, %98 : vector<8x128xf32>
    %100 = arith.negf %99 : vector<8x128xf32>
    %101 = math.exp %100 : vector<8x128xf32>
    %cst_31 = arith.constant 1.000000e+00 : f32
    %102 = vector.broadcast %cst_31 : f32 to vector<8x128xf32>
    %103 = arith.addf %102, %101 : vector<8x128xf32>
    %104 = arith.divf %102, %103 : vector<8x128xf32>
    %105 = vector.extract_strided_slice %104 {offsets = [0, 0], sizes = [8, 32], strides = [1, 1]} : vector<8x128xf32> to vector<8x32xf32>
    %106 = vector.extract_strided_slice %104 {offsets = [0, 32], sizes = [8, 32], strides = [1, 1]} : vector<8x128xf32> to vector<8x32xf32>
    %107 = vector.extract_strided_slice %104 {offsets = [0, 64], sizes = [8, 32], strides = [1, 1]} : vector<8x128xf32> to vector<8x32xf32>
    %cst_32 = arith.constant 2.000000e+00 : f32
    %108 = vector.broadcast %cst_32 : f32 to vector<8x32xf32>
    %109 = arith.mulf %108, %107 : vector<8x32xf32>
    %cst_33 = arith.constant 1.000000e+00 : f32
    %110 = vector.broadcast %cst_33 : f32 to vector<8x32xf32>
    %111 = arith.subf %109, %110 : vector<8x32xf32>
    %112 = vector.extract_strided_slice %104 {offsets = [0, 96], sizes = [8, 32], strides = [1, 1]} : vector<8x128xf32> to vector<8x32xf32>
    %113 = arith.mulf %106, %92 : vector<8x32xf32>
    %114 = arith.mulf %105, %111 : vector<8x32xf32>
    %115 = arith.addf %113, %114 : vector<8x32xf32>
    %116 = math.tanh %115 : vector<8x32xf32>
    %117 = arith.mulf %112, %116 : vector<8x32xf32>
    %c5_i32 = arith.constant 5 : i32
    %118 = arith.index_cast %c5_i32 : i32 to index
    %c0_34 = arith.constant 0 : index
    %c0_35 = arith.constant 0 : index
    %119 = vector.load %arg0[%118, %c0_34, %c0_35] : memref<8x8x128xf32, #tpu.memory_space<vmem>>, vector<1x8x128xf32>
    %120 = vector.shape_cast %119 : vector<1x8x128xf32> to vector<8x128xf32>
    %cst_36 = arith.constant dense<0.000000e+00> : vector<8x128xf32>
    %121 = tpu.matmul %117, %0, %cst_36 {dimension_numbers = #tpu.dot_dimension_numbers<[1], [0], [0], [1], [0, 0, 1, 1], [], []>} : vector<8x32xf32>, vector<32x128xf32>, vector<8x128xf32> -> vector<8x128xf32>
    %122 = arith.addf %120, %121 : vector<8x128xf32>
    %123 = arith.negf %122 : vector<8x128xf32>
    %124 = math.exp %123 : vector<8x128xf32>
    %cst_37 = arith.constant 1.000000e+00 : f32
    %125 = vector.broadcast %cst_37 : f32 to vector<8x128xf32>
    %126 = arith.addf %125, %124 : vector<8x128xf32>
    %127 = arith.divf %125, %126 : vector<8x128xf32>
    %128 = vector.extract_strided_slice %127 {offsets = [0, 0], sizes = [8, 32], strides = [1, 1]} : vector<8x128xf32> to vector<8x32xf32>
    %129 = vector.extract_strided_slice %127 {offsets = [0, 32], sizes = [8, 32], strides = [1, 1]} : vector<8x128xf32> to vector<8x32xf32>
    %130 = vector.extract_strided_slice %127 {offsets = [0, 64], sizes = [8, 32], strides = [1, 1]} : vector<8x128xf32> to vector<8x32xf32>
    %cst_38 = arith.constant 2.000000e+00 : f32
    %131 = vector.broadcast %cst_38 : f32 to vector<8x32xf32>
    %132 = arith.mulf %131, %130 : vector<8x32xf32>
    %cst_39 = arith.constant 1.000000e+00 : f32
    %133 = vector.broadcast %cst_39 : f32 to vector<8x32xf32>
    %134 = arith.subf %132, %133 : vector<8x32xf32>
    %135 = vector.extract_strided_slice %127 {offsets = [0, 96], sizes = [8, 32], strides = [1, 1]} : vector<8x128xf32> to vector<8x32xf32>
    %136 = arith.mulf %129, %115 : vector<8x32xf32>
    %137 = arith.mulf %128, %134 : vector<8x32xf32>
    %138 = arith.addf %136, %137 : vector<8x32xf32>
    %139 = math.tanh %138 : vector<8x32xf32>
    %140 = arith.mulf %135, %139 : vector<8x32xf32>
    %c6_i32 = arith.constant 6 : i32
    %141 = arith.index_cast %c6_i32 : i32 to index
    %c0_40 = arith.constant 0 : index
    %c0_41 = arith.constant 0 : index
    %142 = vector.load %arg0[%141, %c0_40, %c0_41] : memref<8x8x128xf32, #tpu.memory_space<vmem>>, vector<1x8x128xf32>
    %143 = vector.shape_cast %142 : vector<1x8x128xf32> to vector<8x128xf32>
    %cst_42 = arith.constant dense<0.000000e+00> : vector<8x128xf32>
    %144 = tpu.matmul %140, %0, %cst_42 {dimension_numbers = #tpu.dot_dimension_numbers<[1], [0], [0], [1], [0, 0, 1, 1], [], []>} : vector<8x32xf32>, vector<32x128xf32>, vector<8x128xf32> -> vector<8x128xf32>
    %145 = arith.addf %143, %144 : vector<8x128xf32>
    %146 = arith.negf %145 : vector<8x128xf32>
    %147 = math.exp %146 : vector<8x128xf32>
    %cst_43 = arith.constant 1.000000e+00 : f32
    %148 = vector.broadcast %cst_43 : f32 to vector<8x128xf32>
    %149 = arith.addf %148, %147 : vector<8x128xf32>
    %150 = arith.divf %148, %149 : vector<8x128xf32>
    %151 = vector.extract_strided_slice %150 {offsets = [0, 0], sizes = [8, 32], strides = [1, 1]} : vector<8x128xf32> to vector<8x32xf32>
    %152 = vector.extract_strided_slice %150 {offsets = [0, 32], sizes = [8, 32], strides = [1, 1]} : vector<8x128xf32> to vector<8x32xf32>
    %153 = vector.extract_strided_slice %150 {offsets = [0, 64], sizes = [8, 32], strides = [1, 1]} : vector<8x128xf32> to vector<8x32xf32>
    %cst_44 = arith.constant 2.000000e+00 : f32
    %154 = vector.broadcast %cst_44 : f32 to vector<8x32xf32>
    %155 = arith.mulf %154, %153 : vector<8x32xf32>
    %cst_45 = arith.constant 1.000000e+00 : f32
    %156 = vector.broadcast %cst_45 : f32 to vector<8x32xf32>
    %157 = arith.subf %155, %156 : vector<8x32xf32>
    %158 = vector.extract_strided_slice %150 {offsets = [0, 96], sizes = [8, 32], strides = [1, 1]} : vector<8x128xf32> to vector<8x32xf32>
    %159 = arith.mulf %152, %138 : vector<8x32xf32>
    %160 = arith.mulf %151, %157 : vector<8x32xf32>
    %161 = arith.addf %159, %160 : vector<8x32xf32>
    %162 = math.tanh %161 : vector<8x32xf32>
    %163 = arith.mulf %158, %162 : vector<8x32xf32>
    %c7_i32 = arith.constant 7 : i32
    %164 = arith.index_cast %c7_i32 : i32 to index
    %c0_46 = arith.constant 0 : index
    %c0_47 = arith.constant 0 : index
    %165 = vector.load %arg0[%164, %c0_46, %c0_47] : memref<8x8x128xf32, #tpu.memory_space<vmem>>, vector<1x8x128xf32>
    %166 = vector.shape_cast %165 : vector<1x8x128xf32> to vector<8x128xf32>
    %cst_48 = arith.constant dense<0.000000e+00> : vector<8x128xf32>
    %167 = tpu.matmul %163, %0, %cst_48 {dimension_numbers = #tpu.dot_dimension_numbers<[1], [0], [0], [1], [0, 0, 1, 1], [], []>} : vector<8x32xf32>, vector<32x128xf32>, vector<8x128xf32> -> vector<8x128xf32>
    %168 = arith.addf %166, %167 : vector<8x128xf32>
    %169 = arith.negf %168 : vector<8x128xf32>
    %170 = math.exp %169 : vector<8x128xf32>
    %cst_49 = arith.constant 1.000000e+00 : f32
    %171 = vector.broadcast %cst_49 : f32 to vector<8x128xf32>
    %172 = arith.addf %171, %170 : vector<8x128xf32>
    %173 = arith.divf %171, %172 : vector<8x128xf32>
    %174 = vector.extract_strided_slice %173 {offsets = [0, 0], sizes = [8, 32], strides = [1, 1]} : vector<8x128xf32> to vector<8x32xf32>
    %175 = vector.extract_strided_slice %173 {offsets = [0, 32], sizes = [8, 32], strides = [1, 1]} : vector<8x128xf32> to vector<8x32xf32>
    %176 = vector.extract_strided_slice %173 {offsets = [0, 64], sizes = [8, 32], strides = [1, 1]} : vector<8x128xf32> to vector<8x32xf32>
    %cst_50 = arith.constant 2.000000e+00 : f32
    %177 = vector.broadcast %cst_50 : f32 to vector<8x32xf32>
    %178 = arith.mulf %177, %176 : vector<8x32xf32>
    %cst_51 = arith.constant 1.000000e+00 : f32
    %179 = vector.broadcast %cst_51 : f32 to vector<8x32xf32>
    %180 = arith.subf %178, %179 : vector<8x32xf32>
    %181 = vector.extract_strided_slice %173 {offsets = [0, 96], sizes = [8, 32], strides = [1, 1]} : vector<8x128xf32> to vector<8x32xf32>
    %182 = arith.mulf %175, %161 : vector<8x32xf32>
    %183 = arith.mulf %174, %180 : vector<8x32xf32>
    %184 = arith.addf %182, %183 : vector<8x32xf32>
    %185 = math.tanh %184 : vector<8x32xf32>
    %186 = arith.mulf %181, %185 : vector<8x32xf32>
    %c8_i32 = arith.constant 8 : i32
    %c0_52 = arith.constant 0 : index
    %c0_53 = arith.constant 0 : index
    %187 = vector.load %arg4[%c0_52, %c0_53] : memref<8x32xf32, #tpu.memory_space<vmem>>, vector<8x32xf32>
    tpu.vector_store %arg4[%c0_52, %c0_53], %186 {strides = array<i32>} : memref<8x32xf32, #tpu.memory_space<vmem>>, vector<8x32xf32>,
    return
  }
}

</mosaic_0001>

<llo_original>
// kernel: siam_forward.1
$region0: #{siam_forward.1}
  #allocation0 [shape = 'u32[]', space=smem, size = 0x4, offset = 0x4, fixed_abs, tag = 'smem constant byte address 0x4 - core index']
  #allocation1 [shape = 'u32[144,128]{1,0:T(1,128)}', space=vmem, size = 0x12000, scoped, tag = 'internal scratch']
  %s0 = inlined_call_operand.vmem [shape: f32[8,8,128], index: 0, kind: input, shape index: {}]
  %s1 = inlined_call_operand.vmem [shape: f32[8,32], index: 1, kind: input, shape index: {}]
  %s2 = inlined_call_operand.vmem [shape: f32[8,32], index: 2, kind: input, shape index: {}]
  %s3 = inlined_call_operand.vmem [shape: f32[32,128], index: 3, kind: input, shape index: {}]
  %s4 = inlined_call_operand.vmem [shape: f32[8,32], index: 4, kind: output, shape index: {}]
  %s5 = sld [smem:[#allocation0]]
  $region26: #{siam_forward.1} parent=0
    _
  %s7 = ssub.s32 1, %s5
  %s8 = scalar_select 0, %s7, %s5
  // Predicated region
  $region2: #{siam_forward.1} parent=0 // pred_check
    _
  $region3: #{siam_forward.1} parent=0 // pred_check_branch
    %10 = sbr.rel (0) target = $region5
  $region4: #{siam_forward.1} parent=0 // pred_region
    _
  $region5: #{siam_forward.1} parent=0 // pred_fallthru
    _
  // Predicated region
  $region6: #{siam_forward.1} parent=0 // pred_check
    _
  $region7: #{siam_forward.1} parent=0 // pred_check_branch
    %12 = sbr.rel (0) target = $region9
  $region8: #{siam_forward.1} parent=0 // pred_region
    _
  $region9: #{siam_forward.1} parent=0 // pred_fallthru
    _
  // Predicated region
  $region10: #{siam_forward.1} parent=0 // pred_check
    _
  $region11: #{siam_forward.1} parent=0 // pred_check_branch
    %14 = sbr.rel (0) target = $region13
  $region12: #{siam_forward.1} parent=0 // pred_region
    _
  $region13: #{siam_forward.1} parent=0 // pred_fallthru
    _
  // Predicated region
  $region14: #{siam_forward.1} parent=0 // pred_check
    _
  $region15: #{siam_forward.1} parent=0 // pred_check_branch
    %16 = sbr.rel (0) target = $region17
  $region16: #{siam_forward.1} parent=0 // pred_region
    _
  $region17: #{siam_forward.1} parent=0 // pred_fallthru
    _
  %v17 = vld [vmem:[%s3] sm:$0xff]
  %v18 = vld [vmem:[%s3 + $0x8] sm:$0xff]
  %v19 = vld [vmem:[%s3 + $0x10] sm:$0xff]
  %v20 = vld [vmem:[%s3 + $0x18] sm:$0xff]
  %v21 = vld [vmem:[%s1] sm:$0xff]
  %v22 = vld [vmem:[%s2] sm:$0xff]
  %v23 = vld [vmem:[%s0] sm:$0xff]
  %vm24 = vcmask 261120
  %v26 = vsel %vm24, %v21, 0
  %28 = vmatprep.subr.mxu0 0.0
  %29 = vmatpush1.msra.mxu0 %v17
  %30 = vmatprep.subr.mxu0 0.0
  %31 = vmatpush1.msra.mxu0 %v18
  %32 = vmatprep.subr.mxu0 0.0
  %33 = vmatpush1.msra.mxu0 %v19
  %34 = vmatprep.subr.mxu0 0.0
  %35 = vmatpush1.msra.mxu0 %v20
  %36 = vmatprep.subr.mxu0 0.0
  %37 = vmatpush1.msra.mxu0 0.0
  %38 = vmatprep.subr.mxu0 0.0
  %39 = vmatpush1.msra.mxu0 0.0
  %40 = vmatprep.subr.mxu0 0.0
  %41 = vmatpush1.msra.mxu0 0.0
  %42 = vmatprep.subr.mxu0 0.0
  %43 = vmatpush1.msra.mxu0 0.0
  %44 = vmatprep.subr.mxu0 0.0
  %45 = vmatpush1.msra.mxu0 0.0
  %46 = vmatprep.subr.mxu0 0.0
  %47 = vmatpush1.msra.mxu0 0.0
  %48 = vmatprep.subr.mxu0 0.0
  %49 = vmatpush1.msra.mxu0 0.0
  %50 = vmatprep.subr.mxu0 0.0
  %51 = vmatpush1.msra.mxu0 0.0
  %52 = vmatprep.subr.mxu0 0.0
  %53 = vmatpush1.msra.mxu0 0.0
  %54 = vmatprep.subr.mxu0 0.0
  %55 = vmatpush1.msra.mxu0 0.0
  %56 = vmatprep.subr.mxu0 0.0
  %57 = vmatpush1.msra.mxu0 0.0
  %58 = vmatprep.subr.mxu0 0.0
  %59 = vmatpush1.msra.mxu0 0.0
  %60 = vmatprep.subr.mxu0 0.0
  %61 = vmatpush1.msra.mxu0 0.0
  %62 = vmatprep.subr.mxu0 0.0
  %63 = vmatpush1.msra.mxu0 0.0
  %64 = vmatprep.subr.mxu0 0.0
  %65 = vmatpush1.msra.mxu0 0.0
  %66 = vmatprep.subr.mxu0 0.0
  %67 = vmatpush1.msra.mxu0 0.0
  %68 = vmatprep.subr.mxu0 0.0
  %69 = vmatpush1.msra.mxu0 0.0
  %70 = vmatprep.subr.mxu0 0.0
  %71 = vmatpush1.msra.mxu0 0.0
  %72 = vmatprep.subr.mxu0 0.0
  %73 = vmatpush1.msra.mxu0 0.0
  %74 = vmatprep.subr.mxu0 0.0
  %75 = vmatpush1.msra.mxu0 0.0
  %76 = vmatprep.subr.mxu0 0.0
  %77 = vmatpush1.msra.mxu0 0.0
  %78 = vmatprep.subr.mxu0 0.0
  %79 = vmatpush1.msra.mxu0 0.0
  %80 = vmatprep.subr.mxu0 0.0
  %81 = vmatpush1.msra.mxu0 0.0
  %82 = vmatprep.subr.mxu0 0.0
  %83 = vmatpush1.msra.mxu0 0.0
  %84 = vmatprep.subr.mxu0 0.0
  %85 = vmatpush1.msra.mxu0 0.0
  %86 = vmatprep.subr.mxu0 0.0
  %87 = vmatpush1.msra.mxu0 0.0
  %88 = vmatprep.subr.mxu0 0.0
  %89 = vmatpush1.msra.mxu0 0.0
  %90 = vmatprep.subr.mxu0 0.0
  %91 = vmatpush1.msra.mxu0 0.0
  %92 = vmatprep.mubr.f32.mxu0 0.0
  %93 = vmatmul.mubr.f32.gmra.mrb[0].mxu0 %v26
  %v94 = vpop.f32.mrb[0].mxu0
  %v95 = vadd.f32 0.0, %v94
  %v96 = vpop.f32.mrb[0].mxu0
  %97 = vdwg.mxu0
  %v98 = vadd.f32 %v23, %v95
  %v99 = vxor.u32 %v98, 2147483648
  %v100 = vmul.f32 %v99, 1.442695
  %v101 = vpow.pop %v100
  %v102 = vadd.f32 %v101, 1.0
  %v103 = vrcp.pop %v102
  %v104 = vmul.f32 1.0, %v103
  %v105 = vmul.f32 %v104, 2.0
  %v106 = vsub.f32 %v105, 1.0
  %108 = vrot.lane.b32.xlu0 %v22, 32
  %v109 = vpop.permute.xlu0 %108
  %v111 = vmul.f32 %v104, %v109
  %113 = vrot.lane.b32.xlu0 %v106, 64
  %v114 = vpop.permute.xlu0 %113
  %v116 = vmul.f32 %v104, %v114
  %118 = vrot.lane.b32.xlu0 %v116, 32
  %v119 = vpop.permute.xlu0 %118
  %v121 = vadd.f32 %v111, %v119
  %v122 = vtanh.pop %v121
  %124 = vrot.lane.b32.xlu0 %v122, 64
  %v125 = vpop.permute.xlu0 %124
  %v127 = vmul.f32 %v104, %v125
  %s128 = scalar_lea.vmem %s0, 8
  %v129 = vld [vmem:[%s128] sm:$0xff]
  %131 = vrot.lane.b32.xlu0 %v127, 32
  %v132 = vpop.permute.xlu0 %131
  %v133 = vsel %vm24, %v132, 0
  %135 = vmatprep.subr.mxu0 0.0
  %136 = vmatpush1.msra.mxu0 %v17
  %137 = vmatprep.subr.mxu0 0.0
  %138 = vmatpush1.msra.mxu0 %v18
  %139 = vmatprep.subr.mxu0 0.0
  %140 = vmatpush1.msra.mxu0 %v19
  %141 = vmatprep.subr.mxu0 0.0
  %142 = vmatpush1.msra.mxu0 %v20
  %143 = vmatprep.subr.mxu0 0.0
  %144 = vmatpush1.msra.mxu0 0.0
  %145 = vmatprep.subr.mxu0 0.0
  %146 = vmatpush1.msra.mxu0 0.0
  %147 = vmatprep.subr.mxu0 0.0
  %148 = vmatpush1.msra.mxu0 0.0
  %149 = vmatprep.subr.mxu0 0.0
  %150 = vmatpush1.msra.mxu0 0.0
  %151 = vmatprep.subr.mxu0 0.0
  %152 = vmatpush1.msra.mxu0 0.0
  %153 = vmatprep.subr.mxu0 0.0
  %154 = vmatpush1.msra.mxu0 0.0
  %155 = vmatprep.subr.mxu0 0.0
  %156 = vmatpush1.msra.mxu0 0.0
  %157 = vmatprep.subr.mxu0 0.0
  %158 = vmatpush1.msra.mxu0 0.0
  %159 = vmatprep.subr.mxu0 0.0
  %160 = vmatpush1.msra.mxu0 0.0
  %161 = vmatprep.subr.mxu0 0.0
  %162 = vmatpush1.msra.mxu0 0.0
  %163 = vmatprep.subr.mxu0 0.0
  %164 = vmatpush1.msra.mxu0 0.0
  %165 = vmatprep.subr.mxu0 0.0
  %166 = vmatpush1.msra.mxu0 0.0
  %167 = vmatprep.subr.mxu0 0.0
  %168 = vmatpush1.msra.mxu0 0.0
  %169 = vmatprep.subr.mxu0 0.0
  %170 = vmatpush1.msra.mxu0 0.0
  %171 = vmatprep.subr.mxu0 0.0
  %172 = vmatpush1.msra.mxu0 0.0
  %173 = vmatprep.subr.mxu0 0.0
  %174 = vmatpush1.msra.mxu0 0.0
  %175 = vmatprep.subr.mxu0 0.0
  %176 = vmatpush1.msra.mxu0 0.0
  %177 = vmatprep.subr.mxu0 0.0
  %178 = vmatpush1.msra.mxu0 0.0
  %179 = vmatprep.subr.mxu0 0.0
  %180 = vmatpush1.msra.mxu0 0.0
  %181 = vmatprep.subr.mxu0 0.0
  %182 = vmatpush1.msra.mxu0 0.0
  %183 = vmatprep.subr.mxu0 0.0
  %184 = vmatpush1.msra.mxu0 0.0
  %185 = vmatprep.subr.mxu0 0.0
  %186 = vmatpush1.msra.mxu0 0.0
  %187 = vmatprep.subr.mxu0 0.0
  %188 = vmatpush1.msra.mxu0 0.0
  %189 = vmatprep.subr.mxu0 0.0
  %190 = vmatpush1.msra.mxu0 0.0
  %191 = vmatprep.subr.mxu0 0.0
  %192 = vmatpush1.msra.mxu0 0.0
  %193 = vmatprep.subr.mxu0 0.0
  %194 = vmatpush1.msra.mxu0 0.0
  %195 = vmatprep.subr.mxu0 0.0
  %196 = vmatpush1.msra.mxu0 0.0
  %197 = vmatprep.subr.mxu0 0.0
  %198 = vmatpush1.msra.mxu0 0.0
  %199 = vmatprep.mubr.f32.mxu0 0.0
  %200 = vmatmul.mubr.f32.gmra.mrb[0].mxu0 %v133
  %v201 = vpop.f32.mrb[0].mxu0
  %v202 = vadd.f32 0.0, %v201
  %v203 = vpop.f32.mrb[0].mxu0
  %204 = vdwg.mxu0
  %v205 = vadd.f32 %v129, %v202
  %v206 = vxor.u32 %v205, 2147483648
  %v207 = vmul.f32 %v206, 1.442695
  %v208 = vpow.pop %v207
  %v209 = vadd.f32 %v208, 1.0
  %v210 = vrcp.pop %v209
  %v211 = vmul.f32 1.0, %v210
  %v212 = vmul.f32 %v211, 2.0
  %v213 = vsub.f32 %v212, 1.0
  %v214 = vmul.f32 %v211, %v121
  %216 = vrot.lane.b32.xlu0 %v213, 64
  %v217 = vpop.permute.xlu0 %216
  %v219 = vmul.f32 %v211, %v217
  %221 = vrot.lane.b32.xlu0 %v219, 32
  %v222 = vpop.permute.xlu0 %221
  %v224 = vadd.f32 %v214, %v222
  %v225 = vtanh.pop %v224
  %227 = vrot.lane.b32.xlu0 %v225, 64
  %v228 = vpop.permute.xlu0 %227
  %v230 = vmul.f32 %v211, %v228
  %s231 = scalar_lea.vmem %s0, 16
  %v232 = vld [vmem:[%s231] sm:$0xff]
  %234 = vrot.lane.b32.xlu0 %v230, 32
  %v235 = vpop.permute.xlu0 %234
  %v236 = vsel %vm24, %v235, 0
  %238 = vmatprep.subr.mxu0 0.0
  %239 = vmatpush1.msra.mxu0 %v17
  %240 = vmatprep.subr.mxu0 0.0
  %241 = vmatpush1.msra.mxu0 %v18
  %242 = vmatprep.subr.mxu0 0.0
  %243 = vmatpush1.msra.mxu0 %v19
  %244 = vmatprep.subr.mxu0 0.0
  %245 = vmatpush1.msra.mxu0 %v20
  %246 = vmatprep.subr.mxu0 0.0
  %247 = vmatpush1.msra.mxu0 0.0
  %248 = vmatprep.subr.mxu0 0.0
  %249 = vmatpush1.msra.mxu0 0.0
  %250 = vmatprep.subr.mxu0 0.0
  %251 = vmatpush1.msra.mxu0 0.0
  %252 = vmatprep.subr.mxu0 0.0
  %253 = vmatpush1.msra.mxu0 0.0
  %254 = vmatprep.subr.mxu0 0.0
  %255 = vmatpush1.msra.mxu0 0.0
  %256 = vmatprep.subr.mxu0 0.0
  %257 = vmatpush1.msra.mxu0 0.0
  %258 = vmatprep.subr.mxu0 0.0
  %259 = vmatpush1.msra.mxu0 0.0
  %260 = vmatprep.subr.mxu0 0.0
  %261 = vmatpush1.msra.mxu0 0.0
  %262 = vmatprep.subr.mxu0 0.0
  %263 = vmatpush1.msra.mxu0 0.0
  %264 = vmatprep.subr.mxu0 0.0
  %265 = vmatpush1.msra.mxu0 0.0
  %266 = vmatprep.subr.mxu0 0.0
  %267 = vmatpush1.msra.mxu0 0.0
  %268 = vmatprep.subr.mxu0 0.0
  %269 = vmatpush1.msra.mxu0 0.0
  %270 = vmatprep.subr.mxu0 0.0
  %271 = vmatpush1.msra.mxu0 0.0
  %272 = vmatprep.subr.mxu0 0.0
  %273 = vmatpush1.msra.mxu0 0.0
  %274 = vmatprep.subr.mxu0 0.0
  %275 = vmatpush1.msra.mxu0 0.0
  %276 = vmatprep.subr.mxu0 0.0
  %277 = vmatpush1.msra.mxu0 0.0
  %278 = vmatprep.subr.mxu0 0.0
  %279 = vmatpush1.msra.mxu0 0.0
  %280 = vmatprep.subr.mxu0 0.0
  %281 = vmatpush1.msra.mxu0 0.0
  %282 = vmatprep.subr.mxu0 0.0
  %283 = vmatpush1.msra.mxu0 0.0
  %284 = vmatprep.subr.mxu0 0.0
  %285 = vmatpush1.msra.mxu0 0.0
  %286 = vmatprep.subr.mxu0 0.0
  %287 = vmatpush1.msra.mxu0 0.0
  %288 = vmatprep.subr.mxu0 0.0
  %289 = vmatpush1.msra.mxu0 0.0
  %290 = vmatprep.subr.mxu0 0.0
  %291 = vmatpush1.msra.mxu0 0.0
  %292 = vmatprep.subr.mxu0 0.0
  %293 = vmatpush1.msra.mxu0 0.0
  %294 = vmatprep.subr.mxu0 0.0
  %295 = vmatpush1.msra.mxu0 0.0
  %296 = vmatprep.subr.mxu0 0.0
  %297 = vmatpush1.msra.mxu0 0.0
  %298 = vmatprep.subr.mxu0 0.0
  %299 = vmatpush1.msra.mxu0 0.0
  %300 = vmatprep.subr.mxu0 0.0
  %301 = vmatpush1.msra.mxu0 0.0
  %302 = vmatprep.mubr.f32.mxu0 0.0
  %303 = vmatmul.mubr.f32.gmra.mrb[0].mxu0 %v236
  %v304 = vpop.f32.mrb[0].mxu0
  %v305 = vadd.f32 0.0, %v304
  %v306 = vpop.f32.mrb[0].mxu0
  %307 = vdwg.mxu0
  %v308 = vadd.f32 %v232, %v305
  %v309 = vxor.u32 %v308, 2147483648
  %v310 = vmul.f32 %v309, 1.442695
  %v311 = vpow.pop %v310
  %v312 = vadd.f32 %v311, 1.0
  %v313 = vrcp.pop %v312
  %v314 = vmul.f32 1.0, %v313
  %v315 = vmul.f32 %v314, 2.0
  %v316 = vsub.f32 %v315, 1.0
  %v317 = vmul.f32 %v314, %v224
  %319 = vrot.lane.b32.xlu0 %v316, 64
  %v320 = vpop.permute.xlu0 %319
  %v322 = vmul.f32 %v314, %v320
  %324 = vrot.lane.b32.xlu0 %v322, 32
  %v325 = vpop.permute.xlu0 %324
  %v327 = vadd.f32 %v317, %v325
  %v328 = vtanh.pop %v327
  %330 = vrot.lane.b32.xlu0 %v328, 64
  %v331 = vpop.permute.xlu0 %330
  %v333 = vmul.f32 %v314, %v331
  %s334 = scalar_lea.vmem %s0, 24
  %v335 = vld [vmem:[%s334] sm:$0xff]
  %337 = vrot.lane.b32.xlu0 %v333, 32
  %v338 = vpop.permute.xlu0 %337
  %v339 = vsel %vm24, %v338, 0
  %341 = vmatprep.subr.mxu0 0.0
  %342 = vmatpush1.msra.mxu0 %v17
  %343 = vmatprep.subr.mxu0 0.0
  %344 = vmatpush1.msra.mxu0 %v18
  %345 = vmatprep.subr.mxu0 0.0
  %346 = vmatpush1.msra.mxu0 %v19
  %347 = vmatprep.subr.mxu0 0.0
  %348 = vmatpush1.msra.mxu0 %v20
  %349 = vmatprep.subr.mxu0 0.0
  %350 = vmatpush1.msra.mxu0 0.0
  %351 = vmatprep.subr.mxu0 0.0
  %352 = vmatpush1.msra.mxu0 0.0
  %353 = vmatprep.subr.mxu0 0.0
  %354 = vmatpush1.msra.mxu0 0.0
  %355 = vmatprep.subr.mxu0 0.0
  %356 = vmatpush1.msra.mxu0 0.0
  %357 = vmatprep.subr.mxu0 0.0
  %358 = vmatpush1.msra.mxu0 0.0
  %359 = vmatprep.subr.mxu0 0.0
  %360 = vmatpush1.msra.mxu0 0.0
  %361 = vmatprep.subr.mxu0 0.0
  %362 = vmatpush1.msra.mxu0 0.0
  %363 = vmatprep.subr.mxu0 0.0
  %364 = vmatpush1.msra.mxu0 0.0
  %365 = vmatprep.subr.mxu0 0.0
  %366 = vmatpush1.msra.mxu0 0.0
  %367 = vmatprep.subr.mxu0 0.0
  %368 = vmatpush1.msra.mxu0 0.0
  %369 = vmatprep.subr.mxu0 0.0
  %370 = vmatpush1.msra.mxu0 0.0
  %371 = vmatprep.subr.mxu0 0.0
  %372 = vmatpush1.msra.mxu0 0.0
  %373 = vmatprep.subr.mxu0 0.0
  %374 = vmatpush1.msra.mxu0 0.0
  %375 = vmatprep.subr.mxu0 0.0
  %376 = vmatpush1.msra.mxu0 0.0
  %377 = vmatprep.subr.mxu0 0.0
  %378 = vmatpush1.msra.mxu0 0.0
  %379 = vmatprep.subr.mxu0 0.0
  %380 = vmatpush1.msra.mxu0 0.0
  %381 = vmatprep.subr.mxu0 0.0
  %382 = vmatpush1.msra.mxu0 0.0
  %383 = vmatprep.subr.mxu0 0.0
  %384 = vmatpush1.msra.mxu0 0.0
  %385 = vmatprep.subr.mxu0 0.0
  %386 = vmatpush1.msra.mxu0 0.0
  %387 = vmatprep.subr.mxu0 0.0
  %388 = vmatpush1.msra.mxu0 0.0
  %389 = vmatprep.subr.mxu0 0.0
  %390 = vmatpush1.msra.mxu0 0.0
  %391 = vmatprep.subr.mxu0 0.0
  %392 = vmatpush1.msra.mxu0 0.0
  %393 = vmatprep.subr.mxu0 0.0
  %394 = vmatpush1.msra.mxu0 0.0
  %395 = vmatprep.subr.mxu0 0.0
  %396 = vmatpush1.msra.mxu0 0.0
  %397 = vmatprep.subr.mxu0 0.0
  %398 = vmatpush1.msra.mxu0 0.0
  %399 = vmatprep.subr.mxu0 0.0
  %400 = vmatpush1.msra.mxu0 0.0
  %401 = vmatprep.subr.mxu0 0.0
  %402 = vmatpush1.msra.mxu0 0.0
  %403 = vmatprep.subr.mxu0 0.0
  %404 = vmatpush1.msra.mxu0 0.0
  %405 = vmatprep.mubr.f32.mxu0 0.0
  %406 = vmatmul.mubr.f32.gmra.mrb[0].mxu0 %v339
  %v407 = vpop.f32.mrb[0].mxu0
  %v408 = vadd.f32 0.0, %v407
  %v409 = vpop.f32.mrb[0].mxu0
  %410 = vdwg.mxu0
  %v411 = vadd.f32 %v335, %v408
  %v412 = vxor.u32 %v411, 2147483648
  %v413 = vmul.f32 %v412, 1.442695
  %v414 = vpow.pop %v413
  %v415 = vadd.f32 %v414, 1.0
  %v416 = vrcp.pop %v415
  %v417 = vmul.f32 1.0, %v416
  %v418 = vmul.f32 %v417, 2.0
  %v419 = vsub.f32 %v418, 1.0
  %v420 = vmul.f32 %v417, %v327
  %422 = vrot.lane.b32.xlu0 %v419, 64
  %v423 = vpop.permute.xlu0 %422
  %v425 = vmul.f32 %v417, %v423
  %427 = vrot.lane.b32.xlu0 %v425, 32
  %v428 = vpop.permute.xlu0 %427
  %v430 = vadd.f32 %v420, %v428
  %v431 = vtanh.pop %v430
  %433 = vrot.lane.b32.xlu0 %v431, 64
  %v434 = vpop.permute.xlu0 %433
  %v436 = vmul.f32 %v417, %v434
  %s437 = scalar_lea.vmem %s0, 32
  %v438 = vld [vmem:[%s437] sm:$0xff]
  %440 = vrot.lane.b32.xlu0 %v436, 32
  %v441 = vpop.permute.xlu0 %440
  %v442 = vsel %vm24, %v441, 0
  %444 = vmatprep.subr.mxu0 0.0
  %445 = vmatpush1.msra.mxu0 %v17
  %446 = vmatprep.subr.mxu0 0.0
  %447 = vmatpush1.msra.mxu0 %v18
  %448 = vmatprep.subr.mxu0 0.0
  %449 = vmatpush1.msra.mxu0 %v19
  %450 = vmatprep.subr.mxu0 0.0
  %451 = vmatpush1.msra.mxu0 %v20
  %452 = vmatprep.subr.mxu0 0.0
  %453 = vmatpush1.msra.mxu0 0.0
  %454 = vmatprep.subr.mxu0 0.0
  %455 = vmatpush1.msra.mxu0 0.0
  %456 = vmatprep.subr.mxu0 0.0
  %457 = vmatpush1.msra.mxu0 0.0
  %458 = vmatprep.subr.mxu0 0.0
  %459 = vmatpush1.msra.mxu0 0.0
  %460 = vmatprep.subr.mxu0 0.0
  %461 = vmatpush1.msra.mxu0 0.0
  %462 = vmatprep.subr.mxu0 0.0
  %463 = vmatpush1.msra.mxu0 0.0
  %464 = vmatprep.subr.mxu0 0.0
  %465 = vmatpush1.msra.mxu0 0.0
  %466 = vmatprep.subr.mxu0 0.0
  %467 = vmatpush1.msra.mxu0 0.0
  %468 = vmatprep.subr.mxu0 0.0
  %469 = vmatpush1.msra.mxu0 0.0
  %470 = vmatprep.subr.mxu0 0.0
  %471 = vmatpush1.msra.mxu0 0.0
  %472 = vmatprep.subr.mxu0 0.0
  %473 = vmatpush1.msra.mxu0 0.0
  %474 = vmatprep.subr.mxu0 0.0
  %475 = vmatpush1.msra.mxu0 0.0
  %476 = vmatprep.subr.mxu0 0.0
  %477 = vmatpush1.msra.mxu0 0.0
  %478 = vmatprep.subr.mxu0 0.0
  %479 = vmatpush1.msra.mxu0 0.0
  %480 = vmatprep.subr.mxu0 0.0
  %481 = vmatpush1.msra.mxu0 0.0
  %482 = vmatprep.subr.mxu0 0.0
  %483 = vmatpush1.msra.mxu0 0.0
  %484 = vmatprep.subr.mxu0 0.0
  %485 = vmatpush1.msra.mxu0 0.0
  %486 = vmatprep.subr.mxu0 0.0
  %487 = vmatpush1.msra.mxu0 0.0
  %488 = vmatprep.subr.mxu0 0.0
  %489 = vmatpush1.msra.mxu0 0.0
  %490 = vmatprep.subr.mxu0 0.0
  %491 = vmatpush1.msra.mxu0 0.0
  %492 = vmatprep.subr.mxu0 0.0
  %493 = vmatpush1.msra.mxu0 0.0
  %494 = vmatprep.subr.mxu0 0.0
  %495 = vmatpush1.msra.mxu0 0.0
  %496 = vmatprep.subr.mxu0 0.0
  %497 = vmatpush1.msra.mxu0 0.0
  %498 = vmatprep.subr.mxu0 0.0
  %499 = vmatpush1.msra.mxu0 0.0
  %500 = vmatprep.subr.mxu0 0.0
  %501 = vmatpush1.msra.mxu0 0.0
  %502 = vmatprep.subr.mxu0 0.0
  %503 = vmatpush1.msra.mxu0 0.0
  %504 = vmatprep.subr.mxu0 0.0
  %505 = vmatpush1.msra.mxu0 0.0
  %506 = vmatprep.subr.mxu0 0.0
  %507 = vmatpush1.msra.mxu0 0.0
  %508 = vmatprep.mubr.f32.mxu0 0.0
  %509 = vmatmul.mubr.f32.gmra.mrb[0].mxu0 %v442
  %v510 = vpop.f32.mrb[0].mxu0
  %v511 = vadd.f32 0.0, %v510
  %v512 = vpop.f32.mrb[0].mxu0
  %513 = vdwg.mxu0
  %v514 = vadd.f32 %v438, %v511
  %v515 = vxor.u32 %v514, 2147483648
  %v516 = vmul.f32 %v515, 1.442695
  %v517 = vpow.pop %v516
  %v518 = vadd.f32 %v517, 1.0
  %v519 = vrcp.pop %v518
  %v520 = vmul.f32 1.0, %v519
  %v521 = vmul.f32 %v520, 2.0
  %v522 = vsub.f32 %v521, 1.0
  %v523 = vmul.f32 %v520, %v430
  %525 = vrot.lane.b32.xlu0 %v522, 64
  %v526 = vpop.permute.xlu0 %525
  %v528 = vmul.f32 %v520, %v526
  %530 = vrot.lane.b32.xlu0 %v528, 32
  %v531 = vpop.permute.xlu0 %530
  %v533 = vadd.f32 %v523, %v531
  %v534 = vtanh.pop %v533
  %536 = vrot.lane.b32.xlu0 %v534, 64
  %v537 = vpop.permute.xlu0 %536
  %v539 = vmul.f32 %v520, %v537
  %s540 = scalar_lea.vmem %s0, 40
  %v541 = vld [vmem:[%s540] sm:$0xff]
  %543 = vrot.lane.b32.xlu0 %v539, 32
  %v544 = vpop.permute.xlu0 %543
  %v545 = vsel %vm24, %v544, 0
  %547 = vmatprep.subr.mxu0 0.0
  %548 = vmatpush1.msra.mxu0 %v17
  %549 = vmatprep.subr.mxu0 0.0
  %550 = vmatpush1.msra.mxu0 %v18
  %551 = vmatprep.subr.mxu0 0.0
  %552 = vmatpush1.msra.mxu0 %v19
  %553 = vmatprep.subr.mxu0 0.0
  %554 = vmatpush1.msra.mxu0 %v20
  %555 = vmatprep.subr.mxu0 0.0
  %556 = vmatpush1.msra.mxu0 0.0
  %557 = vmatprep.subr.mxu0 0.0
  %558 = vmatpush1.msra.mxu0 0.0
  %559 = vmatprep.subr.mxu0 0.0
  %560 = vmatpush1.msra.mxu0 0.0
  %561 = vmatprep.subr.mxu0 0.0
  %562 = vmatpush1.msra.mxu0 0.0
  %563 = vmatprep.subr.mxu0 0.0
  %564 = vmatpush1.msra.mxu0 0.0
  %565 = vmatprep.subr.mxu0 0.0
  %566 = vmatpush1.msra.mxu0 0.0
  %567 = vmatprep.subr.mxu0 0.0
  %568 = vmatpush1.msra.mxu0 0.0
  %569 = vmatprep.subr.mxu0 0.0
  %570 = vmatpush1.msra.mxu0 0.0
  %571 = vmatprep.subr.mxu0 0.0
  %572 = vmatpush1.msra.mxu0 0.0
  %573 = vmatprep.subr.mxu0 0.0
  %574 = vmatpush1.msra.mxu0 0.0
  %575 = vmatprep.subr.mxu0 0.0
  %576 = vmatpush1.msra.mxu0 0.0
  %577 = vmatprep.subr.mxu0 0.0
  %578 = vmatpush1.msra.mxu0 0.0
  %579 = vmatprep.subr.mxu0 0.0
  %580 = vmatpush1.msra.mxu0 0.0
  %581 = vmatprep.subr.mxu0 0.0
  %582 = vmatpush1.msra.mxu0 0.0
  %583 = vmatprep.subr.mxu0 0.0
  %584 = vmatpush1.msra.mxu0 0.0
  %585 = vmatprep.subr.mxu0 0.0
  %586 = vmatpush1.msra.mxu0 0.0
  %587 = vmatprep.subr.mxu0 0.0
  %588 = vmatpush1.msra.mxu0 0.0
  %589 = vmatprep.subr.mxu0 0.0
  %590 = vmatpush1.msra.mxu0 0.0
  %591 = vmatprep.subr.mxu0 0.0
  %592 = vmatpush1.msra.mxu0 0.0
  %593 = vmatprep.subr.mxu0 0.0
  %594 = vmatpush1.msra.mxu0 0.0
  %595 = vmatprep.subr.mxu0 0.0
  %596 = vmatpush1.msra.mxu0 0.0
  %597 = vmatprep.subr.mxu0 0.0
  %598 = vmatpush1.msra.mxu0 0.0
  %599 = vmatprep.subr.mxu0 0.0
  %600 = vmatpush1.msra.mxu0 0.0
  %601 = vmatprep.subr.mxu0 0.0
  %602 = vmatpush1.msra.mxu0 0.0
  %603 = vmatprep.subr.mxu0 0.0
  %604 = vmatpush1.msra.mxu0 0.0
  %605 = vmatprep.subr.mxu0 0.0
  %606 = vmatpush1.msra.mxu0 0.0
  %607 = vmatprep.subr.mxu0 0.0
  %608 = vmatpush1.msra.mxu0 0.0
  %609 = vmatprep.subr.mxu0 0.0
  %610 = vmatpush1.msra.mxu0 0.0
  %611 = vmatprep.mubr.f32.mxu0 0.0
  %612 = vmatmul.mubr.f32.gmra.mrb[0].mxu0 %v545
  %v613 = vpop.f32.mrb[0].mxu0
  %v614 = vadd.f32 0.0, %v613
  %v615 = vpop.f32.mrb[0].mxu0
  %616 = vdwg.mxu0
  %v617 = vadd.f32 %v541, %v614
  %v618 = vxor.u32 %v617, 2147483648
  %v619 = vmul.f32 %v618, 1.442695
  %v620 = vpow.pop %v619
  %v621 = vadd.f32 %v620, 1.0
  %v622 = vrcp.pop %v621
  %v623 = vmul.f32 1.0, %v622
  %v624 = vmul.f32 %v623, 2.0
  %v625 = vsub.f32 %v624, 1.0
  %v626 = vmul.f32 %v623, %v533
  %628 = vrot.lane.b32.xlu0 %v625, 64
  %v629 = vpop.permute.xlu0 %628
  %v631 = vmul.f32 %v623, %v629
  %633 = vrot.lane.b32.xlu0 %v631, 32
  %v634 = vpop.permute.xlu0 %633
  %v636 = vadd.f32 %v626, %v634
  %v637 = vtanh.pop %v636
  %639 = vrot.lane.b32.xlu0 %v637, 64
  %v640 = vpop.permute.xlu0 %639
  %v642 = vmul.f32 %v623, %v640
  %s643 = scalar_lea.vmem %s0, 48
  %v644 = vld [vmem:[%s643] sm:$0xff]
  %646 = vrot.lane.b32.xlu0 %v642, 32
  %v647 = vpop.permute.xlu0 %646
  %v648 = vsel %vm24, %v647, 0
  %650 = vmatprep.subr.mxu0 0.0
  %651 = vmatpush1.msra.mxu0 %v17
  %652 = vmatprep.subr.mxu0 0.0
  %653 = vmatpush1.msra.mxu0 %v18
  %654 = vmatprep.subr.mxu0 0.0
  %655 = vmatpush1.msra.mxu0 %v19
  %656 = vmatprep.subr.mxu0 0.0
  %657 = vmatpush1.msra.mxu0 %v20
  %658 = vmatprep.subr.mxu0 0.0
  %659 = vmatpush1.msra.mxu0 0.0
  %660 = vmatprep.subr.mxu0 0.0
  %661 = vmatpush1.msra.mxu0 0.0
  %662 = vmatprep.subr.mxu0 0.0
  %663 = vmatpush1.msra.mxu0 0.0
  %664 = vmatprep.subr.mxu0 0.0
  %665 = vmatpush1.msra.mxu0 0.0
  %666 = vmatprep.subr.mxu0 0.0
  %667 = vmatpush1.msra.mxu0 0.0
  %668 = vmatprep.subr.mxu0 0.0
  %669 = vmatpush1.msra.mxu0 0.0
  %670 = vmatprep.subr.mxu0 0.0
  %671 = vmatpush1.msra.mxu0 0.0
  %672 = vmatprep.subr.mxu0 0.0
  %673 = vmatpush1.msra.mxu0 0.0
  %674 = vmatprep.subr.mxu0 0.0
  %675 = vmatpush1.msra.mxu0 0.0
  %676 = vmatprep.subr.mxu0 0.0
  %677 = vmatpush1.msra.mxu0 0.0
  %678 = vmatprep.subr.mxu0 0.0
  %679 = vmatpush1.msra.mxu0 0.0
  %680 = vmatprep.subr.mxu0 0.0
  %681 = vmatpush1.msra.mxu0 0.0
  %682 = vmatprep.subr.mxu0 0.0
  %683 = vmatpush1.msra.mxu0 0.0
  %684 = vmatprep.subr.mxu0 0.0
  %685 = vmatpush1.msra.mxu0 0.0
  %686 = vmatprep.subr.mxu0 0.0
  %687 = vmatpush1.msra.mxu0 0.0
  %688 = vmatprep.subr.mxu0 0.0
  %689 = vmatpush1.msra.mxu0 0.0
  %690 = vmatprep.subr.mxu0 0.0
  %691 = vmatpush1.msra.mxu0 0.0
  %692 = vmatprep.subr.mxu0 0.0
  %693 = vmatpush1.msra.mxu0 0.0
  %694 = vmatprep.subr.mxu0 0.0
  %695 = vmatpush1.msra.mxu0 0.0
  %696 = vmatprep.subr.mxu0 0.0
  %697 = vmatpush1.msra.mxu0 0.0
  %698 = vmatprep.subr.mxu0 0.0
  %699 = vmatpush1.msra.mxu0 0.0
  %700 = vmatprep.subr.mxu0 0.0
  %701 = vmatpush1.msra.mxu0 0.0
  %702 = vmatprep.subr.mxu0 0.0
  %703 = vmatpush1.msra.mxu0 0.0
  %704 = vmatprep.subr.mxu0 0.0
  %705 = vmatpush1.msra.mxu0 0.0
  %706 = vmatprep.subr.mxu0 0.0
  %707 = vmatpush1.msra.mxu0 0.0
  %708 = vmatprep.subr.mxu0 0.0
  %709 = vmatpush1.msra.mxu0 0.0
  %710 = vmatprep.subr.mxu0 0.0
  %711 = vmatpush1.msra.mxu0 0.0
  %712 = vmatprep.subr.mxu0 0.0
  %713 = vmatpush1.msra.mxu0 0.0
  %714 = vmatprep.mubr.f32.mxu0 0.0
  %715 = vmatmul.mubr.f32.gmra.mrb[0].mxu0 %v648
  %v716 = vpop.f32.mrb[0].mxu0
  %v717 = vadd.f32 0.0, %v716
  %v718 = vpop.f32.mrb[0].mxu0
  %719 = vdwg.mxu0
  %v720 = vadd.f32 %v644, %v717
  %v721 = vxor.u32 %v720, 2147483648
  %v722 = vmul.f32 %v721, 1.442695
  %v723 = vpow.pop %v722
  %v724 = vadd.f32 %v723, 1.0
  %v725 = vrcp.pop %v724
  %v726 = vmul.f32 1.0, %v725
  %v727 = vmul.f32 %v726, 2.0
  %v728 = vsub.f32 %v727, 1.0
  %v729 = vmul.f32 %v726, %v636
  %731 = vrot.lane.b32.xlu0 %v728, 64
  %v732 = vpop.permute.xlu0 %731
  %v734 = vmul.f32 %v726, %v732
  %736 = vrot.lane.b32.xlu0 %v734, 32
  %v737 = vpop.permute.xlu0 %736
  %v739 = vadd.f32 %v729, %v737
  %v740 = vtanh.pop %v739
  %742 = vrot.lane.b32.xlu0 %v740, 64
  %v743 = vpop.permute.xlu0 %742
  %v745 = vmul.f32 %v726, %v743
  %s746 = scalar_lea.vmem %s0, 56
  %v747 = vld [vmem:[%s746] sm:$0xff]
  %749 = vrot.lane.b32.xlu0 %v745, 32
  %v750 = vpop.permute.xlu0 %749
  %v751 = vsel %vm24, %v750, 0
  %753 = vmatprep.subr.mxu0 0.0
  %754 = vmatpush1.msra.mxu0 %v17
  %755 = vmatprep.subr.mxu0 0.0
  %756 = vmatpush1.msra.mxu0 %v18
  %757 = vmatprep.subr.mxu0 0.0
  %758 = vmatpush1.msra.mxu0 %v19
  %759 = vmatprep.subr.mxu0 0.0
  %760 = vmatpush1.msra.mxu0 %v20
  %761 = vmatprep.subr.mxu0 0.0
  %762 = vmatpush1.msra.mxu0 0.0
  %763 = vmatprep.subr.mxu0 0.0
  %764 = vmatpush1.msra.mxu0 0.0
  %765 = vmatprep.subr.mxu0 0.0
  %766 = vmatpush1.msra.mxu0 0.0
  %767 = vmatprep.subr.mxu0 0.0
  %768 = vmatpush1.msra.mxu0 0.0
  %769 = vmatprep.subr.mxu0 0.0
  %770 = vmatpush1.msra.mxu0 0.0
  %771 = vmatprep.subr.mxu0 0.0
  %772 = vmatpush1.msra.mxu0 0.0
  %773 = vmatprep.subr.mxu0 0.0
  %774 = vmatpush1.msra.mxu0 0.0
  %775 = vmatprep.subr.mxu0 0.0
  %776 = vmatpush1.msra.mxu0 0.0
  %777 = vmatprep.subr.mxu0 0.0
  %778 = vmatpush1.msra.mxu0 0.0
  %779 = vmatprep.subr.mxu0 0.0
  %780 = vmatpush1.msra.mxu0 0.0
  %781 = vmatprep.subr.mxu0 0.0
  %782 = vmatpush1.msra.mxu0 0.0
  %783 = vmatprep.subr.mxu0 0.0
  %784 = vmatpush1.msra.mxu0 0.0
  %785 = vmatprep.subr.mxu0 0.0
  %786 = vmatpush1.msra.mxu0 0.0
  %787 = vmatprep.subr.mxu0 0.0
  %788 = vmatpush1.msra.mxu0 0.0
  %789 = vmatprep.subr.mxu0 0.0
  %790 = vmatpush1.msra.mxu0 0.0
  %791 = vmatprep.subr.mxu0 0.0
  %792 = vmatpush1.msra.mxu0 0.0
  %793 = vmatprep.subr.mxu0 0.0
  %794 = vmatpush1.msra.mxu0 0.0
  %795 = vmatprep.subr.mxu0 0.0
  %796 = vmatpush1.msra.mxu0 0.0
  %797 = vmatprep.subr.mxu0 0.0
  %798 = vmatpush1.msra.mxu0 0.0
  %799 = vmatprep.subr.mxu0 0.0
  %800 = vmatpush1.msra.mxu0 0.0
  %801 = vmatprep.subr.mxu0 0.0
  %802 = vmatpush1.msra.mxu0 0.0
  %803 = vmatprep.subr.mxu0 0.0
  %804 = vmatpush1.msra.mxu0 0.0
  %805 = vmatprep.subr.mxu0 0.0
  %806 = vmatpush1.msra.mxu0 0.0
  %807 = vmatprep.subr.mxu0 0.0
  %808 = vmatpush1.msra.mxu0 0.0
  %809 = vmatprep.subr.mxu0 0.0
  %810 = vmatpush1.msra.mxu0 0.0
  %811 = vmatprep.subr.mxu0 0.0
  %812 = vmatpush1.msra.mxu0 0.0
  %813 = vmatprep.subr.mxu0 0.0
  %814 = vmatpush1.msra.mxu0 0.0
  %815 = vmatprep.subr.mxu0 0.0
  %816 = vmatpush1.msra.mxu0 0.0
  %817 = vmatprep.mubr.f32.mxu0 0.0
  %818 = vmatmul.mubr.f32.gmra.mrb[0].mxu0 %v751
  %v819 = vpop.f32.mrb[0].mxu0
  %v820 = vadd.f32 0.0, %v819
  %v821 = vpop.f32.mrb[0].mxu0
  %822 = vdwg.mxu0
  %v823 = vadd.f32 %v747, %v820
  %v824 = vxor.u32 %v823, 2147483648
  %v825 = vmul.f32 %v824, 1.442695
  %v826 = vpow.pop %v825
  %v827 = vadd.f32 %v826, 1.0
  %v828 = vrcp.pop %v827
  %v829 = vmul.f32 1.0, %v828
  %v830 = vmul.f32 %v829, 2.0
  %v831 = vsub.f32 %v830, 1.0
  %v832 = vmul.f32 %v829, %v739
  %834 = vrot.lane.b32.xlu0 %v831, 64
  %v835 = vpop.permute.xlu0 %834
  %v837 = vmul.f32 %v829, %v835
  %839 = vrot.lane.b32.xlu0 %v837, 32
  %v840 = vpop.permute.xlu0 %839
  %v842 = vadd.f32 %v832, %v840
  %v843 = vtanh.pop %v842
  %845 = vrot.lane.b32.xlu0 %v843, 64
  %v846 = vpop.permute.xlu0 %845
  %v848 = vmul.f32 %v829, %v846
  %850 = vrot.lane.b32.xlu0 %v848, 32
  %v851 = vpop.permute.xlu0 %850
  %853 = vst.msk [vmem:[%s4] sm:$0xff] %vm24, %v851
  // Predicated region
  $region18: #{siam_forward.1} parent=0 // pred_check
    _
  $region19: #{siam_forward.1} parent=0 // pred_check_branch
    %855 = sbr.rel (0) target = $region21
  $region20: #{siam_forward.1} parent=0 // pred_region
    _
  $region21: #{siam_forward.1} parent=0 // pred_fallthru
    _
  // Predicated region
  $region22: #{siam_forward.1} parent=0 // pred_check
    _
  $region23: #{siam_forward.1} parent=0 // pred_check_branch
    %857 = sbr.rel (0) target = $region25
  $region24: #{siam_forward.1} parent=0 // pred_region
    _
  $region25: #{siam_forward.1} parent=0 // pred_fallthru
    _

</llo_original>
